<compile_context>
chip_gen: v7x
topology: tpu7x:2x2x1
jax: 0.10.0
libtpu: 0.0.40
codegen_flags: <defaults>
</compile_context>

<pallas_src>
import functools

import jax
import jax.numpy as jnp
from jax.experimental import pallas as pl
from jax.experimental.pallas import tpu as pltpu


def _round_up(x, m):
  return (x + m - 1) // m * m


def _upsampler_kernel(x_ref, w_ref, shift_ref, o_ref, *, tile_h, width,
                      cin_p, cout_p):
  """One (batch, output-row-tile) grid step.

  x_ref:     (1, H+1, W+1, cin_p)     bf16 image, zero-padded bottom/right + channels
  w_ref:     (4*cin_p, 4*cout_p)      bf16 phase-packed deconv weights (BN scale folded)
  shift_ref: (1, 4*cout_p)            f32 per-phase BN shift (+ conv bias)
  o_ref:     (1, tile_h, W, 4*cout_p) f32 phase-packed output rows
  """
  r = pl.program_id(1)
  y0 = pl.multiple_of(r * tile_h, tile_h)

  # Load this tile's input rows plus one halo row.
  x = x_ref[0, pl.ds(y0, tile_h + 1), :, :]              # (tile_h+1, W+1, cin_p)

  # im2col over the 2x2 tap window -> one lane-dense LHS operand.
  x00 = x[:tile_h, :width, :]
  x01 = x[:tile_h, 1:width + 1, :]
  x10 = x[1:tile_h + 1, :width, :]
  x11 = x[1:tile_h + 1, 1:width + 1, :]
  patch = jnp.concatenate([x00, x01, x10, x11], axis=-1)  # (tile_h, W, 4*cin_p)
  lhs = patch.reshape(tile_h * width, 4 * cin_p)          # bf16

  # Single MXU matmul computing all 4 output phases, f32 accumulation.
  acc = jnp.dot(lhs, w_ref[...], preferred_element_type=jnp.float32)

  # Epilogue in f32: folded BN shift (+ conv bias) then ReLU6.
  y = acc + shift_ref[...]
  y = jnp.clip(y, 0.0, 6.0)
  o_ref[0] = y.reshape(tile_h, width, 4 * cout_p).astype(o_ref.dtype)


def upsampler_block(x_nchw, weight_tc, bias, bn_gamma, bn_beta, bn_mean,
                    bn_var, *, eps=1e-3):
  """Forward pass of UpsamplerBlock (eval-mode BN). Returns NCHW (N, Cout, 2H, 2W)."""
  n, cin, h, w = x_nchw.shape
  cin_w, cout, kh, kw = weight_tc.shape                  # ConvTranspose2d: (Cin, Cout, 3, 3)
  assert cin_w == cin and (kh, kw) == (3, 3)
  oh, ow = 2 * h, 2 * w

  # Channel padding so 4*Cin_p / 4*Cout_p are multiples of 128 (lane dense).
  cin_p = _round_up(cin, 32)
  cout_p = _round_up(cout, 32)

  # Output-row tile: largest of {8,4,2,1} dividing H.
  tile_h = 1
  for t in (8, 4, 2, 1):
    if h % t == 0:
      tile_h = t
      break
  r_tiles = h // tile_h

  # --- glue (plain JAX): layout, padding, parameter folding -----------------
  x = jnp.transpose(x_nchw, (0, 2, 3, 1))                # NHWC
  x = jnp.pad(x, ((0, 0), (0, 1), (0, 1), (0, cin_p - cin)))
  x = x.astype(jnp.bfloat16)

  scale = bn_gamma / jnp.sqrt(bn_var + eps)              # (Cout,)
  shift = bn_beta + (bias - bn_mean) * scale             # (Cout,)

  # Fold BN scale into the deconv weights and pack them for the phase
  # decomposition: phase (ry, rx), tap (di, dj) uses W[:, :, ry+1-2di, rx+1-2dj].
  wt = weight_tc.astype(jnp.float32) * scale[None, :, None, None]  # (Cin,Cout,3,3)
  offsets = ((0, 0), (0, 1), (1, 0), (1, 1))
  w_packed = jnp.zeros((4, cin_p, 4, cout_p), jnp.float32)
  for t_idx, (di, dj) in enumerate(offsets):
    for p_idx, (ry, rx) in enumerate(offsets):
      ky, kx = ry + 1 - 2 * di, rx + 1 - 2 * dj
      if 0 <= ky < 3 and 0 <= kx < 3:
        w_packed = w_packed.at[t_idx, :cin, p_idx, :cout].set(wt[:, :, ky, kx])
  w_packed = w_packed.reshape(4 * cin_p, 4 * cout_p).astype(jnp.bfloat16)

  shift_p = jnp.zeros((cout_p,), jnp.float32).at[:cout].set(shift)
  shift_packed = jnp.tile(shift_p, 4).reshape(1, 4 * cout_p)

  kernel = functools.partial(_upsampler_kernel, tile_h=tile_h, width=w,
                             cin_p=cin_p, cout_p=cout_p)

  out = pl.pallas_call(
      kernel,
      out_shape=jax.ShapeDtypeStruct((n, h, w, 4 * cout_p), jnp.float32),
      grid_spec=pltpu.PrefetchScalarGridSpec(
          num_scalar_prefetch=0,
          grid=(n, r_tiles),
          in_specs=[
              pl.BlockSpec((1, h + 1, w + 1, cin_p), lambda b, r: (b, 0, 0, 0)),
              pl.BlockSpec((4 * cin_p, 4 * cout_p), lambda b, r: (0, 0)),
              pl.BlockSpec((1, 4 * cout_p), lambda b, r: (0, 0)),
          ],
          out_specs=pl.BlockSpec((1, tile_h, w, 4 * cout_p),
                                 lambda b, r: (b, r, 0, 0)),
      ),
      compiler_params=pltpu.CompilerParams(
          dimension_semantics=("parallel", "parallel")),
  )(x, w_packed, shift_packed)

  # Pixel-shuffle the 4 phases into (2H, 2W), drop channel padding, go NCHW.
  out = out.reshape(n, h, w, 2, 2, cout_p)[..., :cout]   # (n, h, w, ry, rx, cout)
  out = jnp.transpose(out, (0, 5, 1, 3, 2, 4)).reshape(n, cout, oh, ow)
  return out


def _reference(x, weight_tc, bias, gamma, beta, mean, var, eps=1e-3):
  """ConvTranspose2d(3, s=2, p=1, op=1) + BN(eval) + ReLU6 via lhs-dilated conv."""
  w_conv = jnp.transpose(weight_tc, (1, 0, 2, 3))[:, :, ::-1, ::-1]  # (Cout,Cin,3,3)
  y = jax.lax.conv_general_dilated(
      x, w_conv, window_strides=(1, 1), padding=[(1, 2), (1, 2)],
      lhs_dilation=(2, 2), rhs_dilation=(1, 1),
      dimension_numbers=("NCHW", "OIHW", "NCHW"))
  y = y + bias.reshape(1, -1, 1, 1)
  y = (y - mean.reshape(1, -1, 1, 1)) / jnp.sqrt(var.reshape(1, -1, 1, 1) + eps)
  y = y * gamma.reshape(1, -1, 1, 1) + beta.reshape(1, -1, 1, 1)
  return jnp.clip(y, 0.0, 6.0)


if __name__ == "__main__":
  key = jax.random.PRNGKey(0)
  k_x, k_w, k_b, k_g, k_be, k_m, k_v = jax.random.split(key, 7)

  N, Cin, H, W = 2, 4, 16, 16
  Cout = 8

  x = jax.random.normal(k_x, (N, Cin, H, W), jnp.float32)
  weight = jax.random.normal(k_w, (Cin, Cout, 3, 3), jnp.float32) * 0.1
  bias = 0.1 * jax.random.normal(k_b, (Cout,), jnp.float32)
  bn_gamma = 1.0 + 0.1 * jax.random.normal(k_g, (Cout,), jnp.float32)
  bn_beta = 0.1 * jax.random.normal(k_be, (Cout,), jnp.float32)
  bn_mean = 0.1 * jax.random.normal(k_m, (Cout,), jnp.float32)
  bn_var = jnp.abs(jax.random.normal(k_v, (Cout,), jnp.float32)) + 0.5

  out = upsampler_block(x, weight, bias, bn_gamma, bn_beta, bn_mean, bn_var)
  out = jax.block_until_ready(out)

  ref = _reference(x, weight, bias, bn_gamma, bn_beta, bn_mean, bn_var)
  assert out.shape == (N, Cout, 2 * H, 2 * W), out.shape
  # bf16 MXU operands -> loosen tolerance accordingly.
  max_err = float(jnp.max(jnp.abs(out - ref)))
  assert jnp.allclose(out, ref, atol=3e-2, rtol=3e-2), max_err

  print("KERNEL_OK")
</pallas_src>

<mosaic_0001>
module attributes {stable_mosaic.version = 11 : i64} {
  func.func @_upsampler_kernel(%arg0: i32, %arg1: i32, %arg2: memref<1x17x17x32xbf16, #tpu.memory_space<vmem>>, %arg3: memref<128x128xbf16, #tpu.memory_space<vmem>>, %arg4: memref<1x128xf32, #tpu.memory_space<vmem>>, %arg5: memref<1x8x16x128xf32, #tpu.memory_space<vmem>>) attributes {dimension_semantics = [#tpu.dimension_semantics<parallel>, #tpu.dimension_semantics<parallel>], iteration_bounds = array<i64: 2, 2>, scalar_prefetch = 0 : i64, scratch_operands = 0 : i64, tpu.core_type = #tpu.core_type<tc>, window_params = [{transform_indices = @transform_0, window_bounds = array<i64: 1, 17, 17, 32>}, {pipeline_mode = #tpu.pipeline_mode<synchronous>, transform_indices = @transform_1, window_bounds = array<i64: 128, 128>}, {pipeline_mode = #tpu.pipeline_mode<synchronous>, transform_indices = @transform_2, window_bounds = array<i64: 1, 128>}, {transform_indices = @transform_3, window_bounds = array<i64: 1, 8, 16, 128>}]} {
    %c8_i32 = arith.constant 8 : i32
    %0 = arith.muli %arg1, %c8_i32 : i32
    %1 = tpu.assume_multiple %0, 8 : i32
    %c0 = arith.constant 0 : index
    %2 = arith.index_cast %1 : i32 to index
    %c0_0 = arith.constant 0 : index
    %c0_1 = arith.constant 0 : index
    %3 = vector.load %arg2[%c0, %2, %c0_0, %c0_1] : memref<1x17x17x32xbf16, #tpu.memory_space<vmem>>, vector<1x9x17x32xbf16>
    %4 = vector.shape_cast %3 : vector<1x9x17x32xbf16> to vector<9x17x32xbf16>
    %5 = vector.extract_strided_slice %4 {offsets = [0, 0, 0], sizes = [8, 16, 32], strides = [1, 1, 1]} : vector<9x17x32xbf16> to vector<8x16x32xbf16>
    %6 = vector.extract_strided_slice %4 {offsets = [0, 1, 0], sizes = [8, 16, 32], strides = [1, 1, 1]} : vector<9x17x32xbf16> to vector<8x16x32xbf16>
    %7 = vector.extract_strided_slice %4 {offsets = [1, 0, 0], sizes = [8, 16, 32], strides = [1, 1, 1]} : vector<9x17x32xbf16> to vector<8x16x32xbf16>
    %8 = vector.extract_strided_slice %4 {offsets = [1, 1, 0], sizes = [8, 16, 32], strides = [1, 1, 1]} : vector<9x17x32xbf16> to vector<8x16x32xbf16>
    %9 = tpu.concatenate %5, %6, %7, %8 in 2 : vector<8x16x32xbf16>, vector<8x16x32xbf16>, vector<8x16x32xbf16>, vector<8x16x32xbf16> -> vector<8x16x128xbf16>
    %10 = vector.shape_cast %9 : vector<8x16x128xbf16> to vector<128x128xbf16>
    %c0_2 = arith.constant 0 : index
    %c0_3 = arith.constant 0 : index
    %11 = vector.load %arg3[%c0_2, %c0_3] : memref<128x128xbf16, #tpu.memory_space<vmem>>, vector<128x128xbf16>
    %cst = arith.constant dense<0.000000e+00> : vector<128x128xf32>
    %12 = tpu.matmul %10, %11, %cst {dimension_numbers = #tpu.dot_dimension_numbers<[1], [0], [0], [1], [0, 0, 1, 1], [], []>} : vector<128x128xbf16>, vector<128x128xbf16>, vector<128x128xf32> -> vector<128x128xf32>
    %c0_4 = arith.constant 0 : index
    %c0_5 = arith.constant 0 : index
    %13 = vector.load %arg4[%c0_4, %c0_5] : memref<1x128xf32, #tpu.memory_space<vmem>>, vector<1x128xf32>
    %14 = vector.broadcast %13 : vector<1x128xf32> to vector<128x128xf32>
    %15 = arith.addf %12, %14 : vector<128x128xf32>
    %cst_6 = arith.constant 0.000000e+00 : f32
    %cst_7 = arith.constant 6.000000e+00 : f32
    %16 = vector.broadcast %cst_6 : f32 to vector<128x128xf32>
    %17 = arith.maximumf %16, %15 : vector<128x128xf32>
    %18 = vector.broadcast %cst_7 : f32 to vector<128x128xf32>
    %19 = arith.minimumf %18, %17 : vector<128x128xf32>
    %20 = vector.shape_cast %19 : vector<128x128xf32> to vector<8x16x128xf32>
    %c0_8 = arith.constant 0 : index
    %c0_9 = arith.constant 0 : index
    %c0_10 = arith.constant 0 : index
    %c0_11 = arith.constant 0 : index
    %21 = vector.load %arg5[%c0_8, %c0_9, %c0_10, %c0_11] : memref<1x8x16x128xf32, #tpu.memory_space<vmem>>, vector<1x8x16x128xf32>
    %22 = vector.shape_cast %21 : vector<1x8x16x128xf32> to vector<8x16x128xf32>
    %23 = vector.shape_cast %20 : vector<8x16x128xf32> to vector<1x8x16x128xf32>
    tpu.vector_store %arg5[%c0_8, %c0_9, %c0_10, %c0_11], %23 {strides = array<i32>} : memref<1x8x16x128xf32, #tpu.memory_space<vmem>>, vector<1x8x16x128xf32>,
    return
  }
  func.func @transform_0(%arg0: i32, %arg1: i32) -> (i32, i32, i32, i32) {
    %c0_i32 = arith.constant 0 : i32
    %c0_i32_0 = arith.constant 0 : i32
    %c0_i32_1 = arith.constant 0 : i32
    %c0_i32_2 = arith.constant 0 : i32
    return %arg0, %c0_i32, %c0_i32_0, %c0_i32_1 : i32, i32, i32, i32
  }
  func.func @transform_1(%arg0: i32, %arg1: i32) -> (i32, i32) {
    %c0_i32 = arith.constant 0 : i32
    %c0_i32_0 = arith.constant 0 : i32
    %c0_i32_1 = arith.constant 0 : i32
    return %c0_i32, %c0_i32_0 : i32, i32
  }
  func.func @transform_2(%arg0: i32, %arg1: i32) -> (i32, i32) {
    %c0_i32 = arith.constant 0 : i32
    %c0_i32_0 = arith.constant 0 : i32
    %c0_i32_1 = arith.constant 0 : i32
    return %c0_i32, %c0_i32_0 : i32, i32
  }
  func.func @transform_3(%arg0: i32, %arg1: i32) -> (i32, i32, i32, i32) {
    %c0_i32 = arith.constant 0 : i32
    %c0_i32_0 = arith.constant 0 : i32
    %c0_i32_1 = arith.constant 0 : i32
    return %arg0, %arg1, %c0_i32, %c0_i32_0 : i32, i32, i32, i32
  }
}

</mosaic_0001>

<llo_original>
// kernel: tpu_custom_call.1
$region0: #{tpu_custom_call.1}
  #allocation0 [shape = 'u32[]', space=smem, size = 0x4, offset = 0x4, fixed_abs, tag = 'smem constant byte address 0x4 - core index']
  #allocation1 [shape = 'u32[144,128]{1,0:T(1,128)}', space=vmem, size = 0x12000, scoped, tag = 'internal scratch']
  %s0 = inlined_call_operand.vmem [shape: bf16[2,17,17,32], index: 0, kind: input, shape index: {}]
  %s1 = inlined_call_operand.vmem [shape: bf16[128,128], index: 1, kind: input, shape index: {}]
  %s2 = inlined_call_operand.vmem [shape: f32[1,128], index: 2, kind: input, shape index: {}]
  %s3 = inlined_call_operand.hbm [shape: f32[2,16,16,128], index: 3, kind: output, shape index: {}]
  %s4 = sld [smem:[#allocation0]]
  $region45: #{tpu_custom_call.1} parent=0
    _
  %s6 = ssub.s32 1, %s4
  %s7 = scalar_select 0, %s6, %s4
  $region1: #{tpu_custom_call.1} parent=0
    #allocation2 [shape = 'u8[131072]{0}', space=vmem, size = 0x20000, scoped, tag = 'output window, operand 0']
    #allocation3 [shape = 's32[2]{0}', space=sflag, size = 0x8, scoped, tag = 'scoped memory for tpu_custom_call.1']
    %8 = vsyncpa [#allocation3], 0
    %s9 = scalar_lea.sflag [#allocation3], 1
    %10 = vsyncpa %s9, 0
    loop: start=0, step=1, limit=6
    $region2: #{tpu_custom_call.1} parent=1 // loop_pre_header
      _
    $region3: #{tpu_custom_call.1} parent=1 // loop_header
      %s12 = sphi 0, %s16
      %p13 = scmp.ge.s32.totalorder %s12, 6
      %s19 = sphi 0, %s31
      %s20 = sphi 0, %s27
      %s21 = sphi 0, %s19
      %s22 = sphi 0, %s20
      %s23 = sphi 0, %s21
      %s24 = sphi 0, %s22
      %s34 = sphi 0, %s36
      %s37 = sphi 0, %s34
      %s38 = sphi 0, %s37
      %s54 = sphi 0, %s38
      %s58 = sphi 0, %s58
      %s60 = sphi 0, %s58
      %s61 = sphi 0, %s60
      %s75 = sphi 0, %s61
      %s79 = sphi 0, %s79
      %s81 = sphi 0, %s79
      %s82 = sphi 0, %s81
      %s96 = sphi 0, %s82
      %s104 = sphi 0, %s106
      %s107 = sphi 0, %s104
      %s108 = sphi 0, %s107
      %s124 = sphi 0, %s108
    $region4: #{tpu_custom_call.1} parent=1 // loop_header_branch
      %15 = sbr.rel (%p13) target = $region8
    $region5: #{tpu_custom_call.1} parent=1 // loop_body
      %s17 = ssub.s32 %s12, 1
      %s18 = ssub.s32 %s12, 2
      %s25 = sadd.s32 1, %s20
      %p26 = scmp.ge.s32.totalorder %s25, 2
      %s27 = scalar_select %p26, 0, %s25
      %s28 = sadd.s32 1, %s19
      %s29 = scalar_select %p26, %s28, %s19
      %p30 = scmp.ge.s32.totalorder %s29, 2
      %s31 = scalar_select %p30, 0, %s29
      %s32 = ssub.s32 %s19, %s31
      %p33 = scmp.eq.s32.totalorder %s32, 0
      %s35 = sadd.s32 %s34, 1
      %s36 = scalar_select %p33, %s34, %s35
      %p39 = pneg %p33
      %p40 = scmp.eq.s32.totalorder %s12, 3
      %p41 = por %p39, %p40
      %p42 = scmp.ne.s32.totalorder %s34, %s37
      %p43 = scmp.eq.s32.totalorder %s12, 0
      %p44 = por %p42, %p43
      %p45 = scmp.ne.s32.totalorder %s34, %s37
      %p46 = scmp.eq.s32.totalorder %s17, 3
      %p47 = por %p45, %p46
      %p48 = scmp.ne.s32.totalorder %s37, %s38
      %p49 = scmp.eq.s32.totalorder %s17, 0
      %p50 = por %p48, %p49
      %p51 = scmp.ne.s32.totalorder %s37, %s38
      %p52 = scmp.eq.s32.totalorder %s18, 3
      %p53 = por %p51, %p52
      %p55 = scmp.ne.s32.totalorder %s38, %s54
      %p56 = scmp.eq.s32.totalorder %s18, 0
      %p57 = por %p55, %p56
      %s59 = sadd.s32 %s58, 1
      %p62 = scmp.eq.s32.totalorder %s12, 3
      %p63 = scmp.ne.s32.totalorder %s58, %s60
      %p64 = scmp.eq.s32.totalorder %s12, 0
      %p65 = por %p63, %p64
      %p66 = scmp.ne.s32.totalorder %s58, %s60
      %p67 = scmp.eq.s32.totalorder %s17, 3
      %p68 = por %p66, %p67
      %p69 = scmp.ne.s32.totalorder %s60, %s61
      %p70 = scmp.eq.s32.totalorder %s17, 0
      %p71 = por %p69, %p70
      %p72 = scmp.ne.s32.totalorder %s60, %s61
      %p73 = scmp.eq.s32.totalorder %s18, 3
      %p74 = por %p72, %p73
      %p76 = scmp.ne.s32.totalorder %s61, %s75
      %p77 = scmp.eq.s32.totalorder %s18, 0
      %p78 = por %p76, %p77
      %s80 = sadd.s32 %s79, 1
      %p83 = scmp.eq.s32.totalorder %s12, 3
      %p84 = scmp.ne.s32.totalorder %s79, %s81
      %p85 = scmp.eq.s32.totalorder %s12, 0
      %p86 = por %p84, %p85
      %p87 = scmp.ne.s32.totalorder %s79, %s81
      %p88 = scmp.eq.s32.totalorder %s17, 3
      %p89 = por %p87, %p88
      %p90 = scmp.ne.s32.totalorder %s81, %s82
      %p91 = scmp.eq.s32.totalorder %s17, 0
      %p92 = por %p90, %p91
      %p93 = scmp.ne.s32.totalorder %s81, %s82
      %p94 = scmp.eq.s32.totalorder %s18, 3
      %p95 = por %p93, %p94
      %p97 = scmp.ne.s32.totalorder %s82, %s96
      %p98 = scmp.eq.s32.totalorder %s18, 0
      %p99 = por %p97, %p98
      %s100 = ssub.s32 %s19, %s31
      %s101 = ssub.s32 %s20, %s27
      %s102 = sor.u32 %s100, %s101
      %p103 = scmp.eq.s32.totalorder %s102, 0
      %s105 = sadd.s32 %s104, 1
      %s106 = scalar_select %p103, %s104, %s105
      %p109 = pneg %p103
      %p110 = scmp.eq.s32.totalorder %s12, 3
      %p111 = por %p109, %p110
      %p112 = scmp.ne.s32.totalorder %s104, %s107
      %p113 = scmp.eq.s32.totalorder %s12, 0
      %p114 = por %p112, %p113
      %p115 = scmp.ne.s32.totalorder %s104, %s107
      %p116 = scmp.eq.s32.totalorder %s17, 3
      %p117 = por %p115, %p116
      %p118 = scmp.ne.s32.totalorder %s107, %s108
      %p119 = scmp.eq.s32.totalorder %s17, 0
      %p120 = por %p118, %p119
      %p121 = scmp.ne.s32.totalorder %s107, %s108
      %p122 = scmp.eq.s32.totalorder %s18, 3
      %p123 = por %p121, %p122
      %p125 = scmp.ne.s32.totalorder %s108, %s124
      %p126 = scmp.eq.s32.totalorder %s18, 0
      %p127 = por %p125, %p126
      %p128 = scmp.le.s32.totalorder 1, %s12
      %p129 = scmp.lt.s32.totalorder %s12, 5
      %p130 = pnand %p128, %p129
      %p131 = pneg %p130
      // Predicated region
      $region9: #{tpu_custom_call.1} parent=5 // pred_check
        _
      $region10: #{tpu_custom_call.1} parent=5 // pred_check_branch
        %133 = sbr.rel (%p130) target = $region12
      $region11: #{tpu_custom_call.1} parent=5 // pred_region
        %s134 = ssub.s32 %s12, 1
        // Predicated region
        $region13: #{tpu_custom_call.1} parent=11 // pred_check
          %p135 = pneg %p71
        $region14: #{tpu_custom_call.1} parent=11 // pred_check_branch
          %137 = sbr.rel (%p135) target = $region16
        $region15: #{tpu_custom_call.1} parent=11 // pred_region
          _
        $region16: #{tpu_custom_call.1} parent=11 // pred_fallthru
          _
        // Predicated region
        $region17: #{tpu_custom_call.1} parent=11 // pred_check
          %p138 = pneg %p92
        $region18: #{tpu_custom_call.1} parent=11 // pred_check_branch
          %140 = sbr.rel (%p138) target = $region20
        $region19: #{tpu_custom_call.1} parent=11 // pred_region
          _
        $region20: #{tpu_custom_call.1} parent=11 // pred_fallthru
          _
      $region12: #{tpu_custom_call.1} parent=5 // pred_fallthru
        _
      %p141 = scmp.lt.s32.totalorder %s12, 4
      // Predicated region
      $region21: #{tpu_custom_call.1} parent=5 // pred_check
        %p142 = pneg %p141
      $region22: #{tpu_custom_call.1} parent=5 // pred_check_branch
        %144 = sbr.rel (%p142) target = $region24
      $region23: #{tpu_custom_call.1} parent=5 // pred_region
        // Predicated region
        $region25: #{tpu_custom_call.1} parent=23 // pred_check
          %p145 = pneg %p44
        $region26: #{tpu_custom_call.1} parent=23 // pred_check_branch
          %147 = sbr.rel (%p145) target = $region28
        $region27: #{tpu_custom_call.1} parent=23 // pred_region
          %p148 = scmp.lt.s32.totalorder %s19, 1
          %s149 = scalar_select %p148, %s19, 1
          %s150 = smul.addr %s149, 51
          %s151 = smul.addr %s150, 4
          %s152 = scalar_lea.vmem %s0, %s151
        $region28: #{tpu_custom_call.1} parent=23 // pred_fallthru
          _
      $region24: #{tpu_custom_call.1} parent=5 // pred_fallthru
        _
      %p153 = scmp.le.s32.totalorder 1, %s12
      %p154 = scmp.lt.s32.totalorder %s12, 5
      %p155 = pnand %p153, %p154
      %p156 = pneg %p155
      // Predicated region
      $region29: #{tpu_custom_call.1} parent=5 // pred_check
        _
      $region30: #{tpu_custom_call.1} parent=5 // pred_check_branch
        %158 = sbr.rel (%p155) target = $region32
      $region31: #{tpu_custom_call.1} parent=5 // pred_region
        %s159 = ssub.s32 %s12, 1
        %p160 = scmp.lt.s32.totalorder %s21, 1
        %s161 = scalar_select %p160, %s21, 1
        %s162 = smul.addr %s161, 51
        %s163 = smul.addr %s162, 4
        %s164 = scalar_lea.vmem %s0, %s163
        %p165 = pneg %p50
        %p166 = pneg %p47
        %p167 = pneg %p71
        %p168 = pneg %p68
        %p169 = pneg %p92
        %p170 = pneg %p89
        %p171 = pneg %p120
        %p172 = pneg %p117
        %s173 = sand.u32 %s107, 1
        %s174 = scalar_lea.sflag [#allocation3], %s173
        %s175 = sand.u32 %s107, 1
        %s176 = smul.addr %s175, 128
        %s177 = scalar_lea.vmem [#allocation2], %s176
        %p178 = scmp.lt.s32.totalorder %s21, 1
        %s179 = scalar_select %p178, %s21, 1
        %s180 = smul.addr %s179, 51
        %s181 = smul.addr %s180, 4
        %s182 = scalar_lea.vmem %s0, %s181
        %s183 = smul.u32 8, %s22
        %s185 = smul.u32 %s22, 8
        %s186 = smul.u32 %s185, 3
        %s187 = smul.addr %s186, 4
        %s188 = scalar_lea.vmem %s182, %s187
        %v189 = vld [vmem:[%s188] sm:$0xf]
        %v190 = vld [vmem:[%s188 + $0x4] sm:$0xf]
        %v191 = vld [vmem:[%s188 + $0x8] sm:$0x1]
        %v192 = vld [vmem:[%s188 + $0xc] sm:$0xf]
        %v193 = vld [vmem:[%s188 + $0x10] sm:$0xf]
        %v194 = vld [vmem:[%s188 + $0x14] sm:$0x1]
        %v195 = vld [vmem:[%s188 + $0x18] sm:$0xf]
        %v196 = vld [vmem:[%s188 + $0x1c] sm:$0xf]
        %v197 = vld [vmem:[%s188 + $0x20] sm:$0x1]
        %v198 = vld [vmem:[%s188 + $0x24] sm:$0xf]
        %v199 = vld [vmem:[%s188 + $0x28] sm:$0xf]
        %v200 = vld [vmem:[%s188 + $0x2c] sm:$0x1]
        %v201 = vld [vmem:[%s188 + $0x30] sm:$0xf]
        %v202 = vld [vmem:[%s188 + $0x34] sm:$0xf]
        %v203 = vld [vmem:[%s188 + $0x38] sm:$0x1]
        %v204 = vld [vmem:[%s188 + $0x3c] sm:$0xf]
        %v205 = vld [vmem:[%s188 + $0x40] sm:$0xf]
        %v206 = vld [vmem:[%s188 + $0x44] sm:$0x1]
        %v207 = vld [vmem:[%s188 + $0x48] sm:$0xf]
        %v208 = vld [vmem:[%s188 + $0x4c] sm:$0xf]
        %v209 = vld [vmem:[%s188 + $0x50] sm:$0x1]
        %v210 = vld [vmem:[%s188 + $0x54] sm:$0xf]
        %v211 = vld [vmem:[%s188 + $0x58] sm:$0xf]
        %v212 = vld [vmem:[%s188 + $0x5c] sm:$0x1]
        %v213 = vld [vmem:[%s188 + $0x60] sm:$0xf]
        %v214 = vld [vmem:[%s188 + $0x64] sm:$0xf]
        %v215 = vld [vmem:[%s188 + $0x68] sm:$0x1]
        %v232 = vunpack.c.l.b16 %v189
        %v233 = vunpack.c.l.b16 %v190
        %v234 = vunpack.c.l.b16 %v192
        %v235 = vunpack.c.l.b16 %v193
        %v236 = vunpack.c.l.b16 %v195
        %v237 = vunpack.c.l.b16 %v196
        %v238 = vunpack.c.l.b16 %v198
        %v239 = vunpack.c.l.b16 %v199
        %v240 = vunpack.c.l.b16 %v201
        %v241 = vunpack.c.l.b16 %v202
        %v242 = vunpack.c.l.b16 %v204
        %v243 = vunpack.c.l.b16 %v205
        %v244 = vunpack.c.l.b16 %v207
        %v245 = vunpack.c.l.b16 %v208
        %v246 = vunpack.c.l.b16 %v210
        %v247 = vunpack.c.l.b16 %v211
        %v248 = vpack.c.b16 %v233, %v232
        %v249 = vpack.c.b16 %v235, %v234
        %v250 = vpack.c.b16 %v237, %v236
        %v251 = vpack.c.b16 %v239, %v238
        %v252 = vpack.c.b16 %v241, %v240
        %v253 = vpack.c.b16 %v243, %v242
        %v254 = vpack.c.b16 %v245, %v244
        %v255 = vpack.c.b16 %v247, %v246
        %v264 = vunpack.c.l.b16 %v191
        %v265 = vunpack.c.l.b16 %v194
        %v266 = vunpack.c.l.b16 %v197
        %v267 = vunpack.c.l.b16 %v200
        %v268 = vunpack.c.l.b16 %v203
        %v269 = vunpack.c.l.b16 %v206
        %v270 = vunpack.c.l.b16 %v209
        %v271 = vunpack.c.l.b16 %v212
        %v272 = vpack.c.b16 %v264, %v264
        %v273 = vpack.c.b16 %v265, %v265
        %v274 = vpack.c.b16 %v266, %v266
        %v275 = vpack.c.b16 %v267, %v267
        %v276 = vpack.c.b16 %v268, %v268
        %v277 = vpack.c.b16 %v269, %v269
        %v278 = vpack.c.b16 %v270, %v270
        %v279 = vpack.c.b16 %v271, %v271
        %vm280 = vsmask.f32 7424
        %v282 = vshrl.u32 %v248, 16
        %v284 = vshll.u32 %v248, 16
        %v286 = vrot.slane %v284, 1
        %v287 = vor.u32 %v282, %v286
        %v289 = vshll.u32 %v272, 16
        %v291 = vrot.slane %v289, 1
        %v292 = vsel %vm280, %v287, %v291
        %v294 = vshrl.u32 %v249, 16
        %v296 = vshll.u32 %v249, 16
        %v298 = vrot.slane %v296, 1
        %v299 = vor.u32 %v294, %v298
        %v301 = vshll.u32 %v273, 16
        %v303 = vrot.slane %v301, 1
        %v304 = vsel %vm280, %v299, %v303
        %v306 = vshrl.u32 %v250, 16
        %v308 = vshll.u32 %v250, 16
        %v310 = vrot.slane %v308, 1
        %v311 = vor.u32 %v306, %v310
        %v313 = vshll.u32 %v274, 16
        %v315 = vrot.slane %v313, 1
        %v316 = vsel %vm280, %v311, %v315
        %v318 = vshrl.u32 %v251, 16
        %v320 = vshll.u32 %v251, 16
        %v322 = vrot.slane %v320, 1
        %v323 = vor.u32 %v318, %v322
        %v325 = vshll.u32 %v275, 16
        %v327 = vrot.slane %v325, 1
        %v328 = vsel %vm280, %v323, %v327
        %v330 = vshrl.u32 %v252, 16
        %v332 = vshll.u32 %v252, 16
        %v334 = vrot.slane %v332, 1
        %v335 = vor.u32 %v330, %v334
        %v337 = vshll.u32 %v276, 16
        %v339 = vrot.slane %v337, 1
        %v340 = vsel %vm280, %v335, %v339
        %v342 = vshrl.u32 %v253, 16
        %v344 = vshll.u32 %v253, 16
        %v346 = vrot.slane %v344, 1
        %v347 = vor.u32 %v342, %v346
        %v349 = vshll.u32 %v277, 16
        %v351 = vrot.slane %v349, 1
        %v352 = vsel %vm280, %v347, %v351
        %v354 = vshrl.u32 %v254, 16
        %v356 = vshll.u32 %v254, 16
        %v358 = vrot.slane %v356, 1
        %v359 = vor.u32 %v354, %v358
        %v361 = vshll.u32 %v278, 16
        %v363 = vrot.slane %v361, 1
        %v364 = vsel %vm280, %v359, %v363
        %v366 = vshrl.u32 %v255, 16
        %v368 = vshll.u32 %v255, 16
        %v370 = vrot.slane %v368, 1
        %v371 = vor.u32 %v366, %v370
        %v373 = vshll.u32 %v279, 16
        %v375 = vrot.slane %v373, 1
        %v376 = vsel %vm280, %v371, %v375
        %377 = vrot.lane.b32.xlu0 %v292, 32
        %v378 = vpop.permute.xlu0 %377
        %379 = vrot.lane.b32.xlu0 %v304, 32
        %v380 = vpop.permute.xlu0 %379
        %381 = vrot.lane.b32.xlu0 %v316, 32
        %v382 = vpop.permute.xlu0 %381
        %383 = vrot.lane.b32.xlu0 %v328, 32
        %v384 = vpop.permute.xlu0 %383
        %385 = vrot.lane.b32.xlu0 %v340, 32
        %v386 = vpop.permute.xlu0 %385
        %387 = vrot.lane.b32.xlu0 %v352, 32
        %v388 = vpop.permute.xlu0 %387
        %389 = vrot.lane.b32.xlu0 %v364, 32
        %v390 = vpop.permute.xlu0 %389
        %391 = vrot.lane.b32.xlu0 %v376, 32
        %v392 = vpop.permute.xlu0 %391
        %v395 = vunpack.c.l.b16 %v213
        %v396 = vunpack.c.l.b16 %v214
        %v397 = vpack.c.b16 %v396, %v395
        %398 = vrot.lane.b32.xlu0 %v249, 64
        %v399 = vpop.permute.xlu0 %398
        %400 = vrot.lane.b32.xlu0 %v250, 64
        %v401 = vpop.permute.xlu0 %400
        %402 = vrot.lane.b32.xlu0 %v251, 64
        %v403 = vpop.permute.xlu0 %402
        %404 = vrot.lane.b32.xlu0 %v252, 64
        %v405 = vpop.permute.xlu0 %404
        %406 = vrot.lane.b32.xlu0 %v253, 64
        %v407 = vpop.permute.xlu0 %406
        %408 = vrot.lane.b32.xlu0 %v254, 64
        %v409 = vpop.permute.xlu0 %408
        %410 = vrot.lane.b32.xlu0 %v255, 64
        %v411 = vpop.permute.xlu0 %410
        %412 = vrot.lane.b32.xlu0 %v397, 64
        %v413 = vpop.permute.xlu0 %412
        %v415 = vunpack.c.l.b16 %v215
        %v416 = vpack.c.b16 %v415, %v415
        %v418 = vshrl.u32 %v397, 16
        %v420 = vshll.u32 %v397, 16
        %v422 = vrot.slane %v420, 1
        %v423 = vor.u32 %v418, %v422
        %v425 = vshll.u32 %v416, 16
        %v427 = vrot.slane %v425, 1
        %v428 = vsel %vm280, %v423, %v427
        %429 = vrot.lane.b32.xlu0 %v304, 96
        %v430 = vpop.permute.xlu0 %429
        %431 = vrot.lane.b32.xlu0 %v316, 96
        %v432 = vpop.permute.xlu0 %431
        %433 = vrot.lane.b32.xlu0 %v328, 96
        %v434 = vpop.permute.xlu0 %433
        %435 = vrot.lane.b32.xlu0 %v340, 96
        %v436 = vpop.permute.xlu0 %435
        %437 = vrot.lane.b32.xlu0 %v352, 96
        %v438 = vpop.permute.xlu0 %437
        %439 = vrot.lane.b32.xlu0 %v364, 96
        %v440 = vpop.permute.xlu0 %439
        %441 = vrot.lane.b32.xlu0 %v376, 96
        %v442 = vpop.permute.xlu0 %441
        %443 = vrot.lane.b32.xlu0 %v428, 96
        %v444 = vpop.permute.xlu0 %443
        %vm445 = vcmask 261120
        %v447 = vsel %vm445, %v248, %v378
        %v449 = vsel %vm445, %v249, %v380
        %v451 = vsel %vm445, %v250, %v382
        %v453 = vsel %vm445, %v251, %v384
        %v455 = vsel %vm445, %v252, %v386
        %v457 = vsel %vm445, %v253, %v388
        %v459 = vsel %vm445, %v254, %v390
        %v461 = vsel %vm445, %v255, %v392
        %vm462 = vcmask 523264
        %v464 = vsel %vm462, %v447, %v399
        %v466 = vsel %vm462, %v449, %v401
        %v468 = vsel %vm462, %v451, %v403
        %v470 = vsel %vm462, %v453, %v405
        %v472 = vsel %vm462, %v455, %v407
        %v474 = vsel %vm462, %v457, %v409
        %v476 = vsel %vm462, %v459, %v411
        %v478 = vsel %vm462, %v461, %v413
        %vm479 = vcmask 785408
        %v481 = vsel %vm479, %v464, %v430
        %v484 = vsel %vm479, %v466, %v432
        %v487 = vsel %vm479, %v468, %v434
        %v490 = vsel %vm479, %v470, %v436
        %v493 = vsel %vm479, %v472, %v438
        %v496 = vsel %vm479, %v474, %v440
        %v499 = vsel %vm479, %v476, %v442
        %v502 = vsel %vm479, %v478, %v444
        %v504 = vld [vmem:[%s1] sm:$0xf]
        %v505 = vld [vmem:[%s1 + $0x4] sm:$0xf]
        %v506 = vld [vmem:[%s1 + $0x8] sm:$0xf]
        %v507 = vld [vmem:[%s1 + $0xc] sm:$0xf]
        %v508 = vld [vmem:[%s1 + $0x10] sm:$0xf]
        %v509 = vld [vmem:[%s1 + $0x14] sm:$0xf]
        %v510 = vld [vmem:[%s1 + $0x18] sm:$0xf]
        %v511 = vld [vmem:[%s1 + $0x1c] sm:$0xf]
        %v512 = vld [vmem:[%s1 + $0x20] sm:$0xf]
        %v513 = vld [vmem:[%s1 + $0x24] sm:$0xf]
        %v514 = vld [vmem:[%s1 + $0x28] sm:$0xf]
        %v515 = vld [vmem:[%s1 + $0x2c] sm:$0xf]
        %v516 = vld [vmem:[%s1 + $0x30] sm:$0xf]
        %v517 = vld [vmem:[%s1 + $0x34] sm:$0xf]
        %v518 = vld [vmem:[%s1 + $0x38] sm:$0xf]
        %v519 = vld [vmem:[%s1 + $0x3c] sm:$0xf]
        %v520 = vld [vmem:[%s2] sm:$0x1]
        %v522 = vlaneseq
        %v523 = vshrl.u32 %v522, 7
        %v524 = vsub.s32 0, %v523
        %v525 = vrot.slane %v520, %v524
        %v543 = vunpack.c.l.b16 %v504
        %v544 = vunpack.c.l.b16 %v505
        %v545 = vunpack.c.l.b16 %v506
        %v546 = vunpack.c.l.b16 %v507
        %v547 = vunpack.c.l.b16 %v508
        %v548 = vunpack.c.l.b16 %v509
        %v549 = vunpack.c.l.b16 %v510
        %v550 = vunpack.c.l.b16 %v511
        %v551 = vunpack.c.l.b16 %v512
        %v552 = vunpack.c.l.b16 %v513
        %v553 = vunpack.c.l.b16 %v514
        %v554 = vunpack.c.l.b16 %v515
        %v555 = vunpack.c.l.b16 %v516
        %v556 = vunpack.c.l.b16 %v517
        %v557 = vunpack.c.l.b16 %v518
        %v558 = vunpack.c.l.b16 %v519
        %v559 = vpack.c.b16 %v544, %v543
        %v560 = vpack.c.b16 %v546, %v545
        %v561 = vpack.c.b16 %v548, %v547
        %v562 = vpack.c.b16 %v550, %v549
        %v563 = vpack.c.b16 %v552, %v551
        %v564 = vpack.c.b16 %v554, %v553
        %v565 = vpack.c.b16 %v556, %v555
        %v566 = vpack.c.b16 %v558, %v557
        %575 = vmatprep.subr.bf16.mxu0 0
        %576 = vmatpush1.bf16.msra.mxu0 %v559
        %577 = vmatprep.subr.bf16.mxu0 0
        %578 = vmatpush1.bf16.msra.mxu0 %v560
        %579 = vmatprep.subr.bf16.mxu0 0
        %580 = vmatpush1.bf16.msra.mxu0 %v561
        %581 = vmatprep.subr.bf16.mxu0 0
        %582 = vmatpush1.bf16.msra.mxu0 %v562
        %583 = vmatprep.subr.bf16.mxu0 0
        %584 = vmatpush1.bf16.msra.mxu0 %v563
        %585 = vmatprep.subr.bf16.mxu0 0
        %586 = vmatpush1.bf16.msra.mxu0 %v564
        %587 = vmatprep.subr.bf16.mxu0 0
        %588 = vmatpush1.bf16.msra.mxu0 %v565
        %589 = vmatprep.subr.bf16.mxu0 0
        %590 = vmatpush1.bf16.msra.mxu0 %v566
        %591 = vmatprep.subr.bf16.mxu0 0
        %592 = vmatpush1.bf16.msra.mxu0 0
        %593 = vmatprep.subr.bf16.mxu0 0
        %594 = vmatpush1.bf16.msra.mxu0 0
        %595 = vmatprep.subr.bf16.mxu0 0
        %596 = vmatpush1.bf16.msra.mxu0 0
        %597 = vmatprep.subr.bf16.mxu0 0
        %598 = vmatpush1.bf16.msra.mxu0 0
        %599 = vmatprep.subr.bf16.mxu0 0
        %600 = vmatpush1.bf16.msra.mxu0 0
        %601 = vmatprep.subr.bf16.mxu0 0
        %602 = vmatpush1.bf16.msra.mxu0 0
        %603 = vmatprep.subr.bf16.mxu0 0
        %604 = vmatpush1.bf16.msra.mxu0 0
        %605 = vmatprep.subr.bf16.mxu0 0
        %606 = vmatpush1.bf16.msra.mxu0 0
        %607 = vmatprep.mubr.bf16.mxu0 0
        %608 = vmatmul.mubr.bf16.gmra.mrb[0].mxu0 %v481
        %v609 = vpop.f32.mrb[0].mxu0
        %v610 = vadd.f32 %v525, %v609
        %v611 = vpop.f32.mrb[0].mxu0
        %v612 = vpop.f32.mrb[0].mxu0
        %v613 = vadd.f32 %v525, %v612
        %v614 = vpop.f32.mrb[0].mxu0
        %615 = vmatprep.mubr.bf16.mxu0 0
        %616 = vmatmul.mubr.bf16.gmra.mrb[0].mxu0 %v484
        %v617 = vpop.f32.mrb[0].mxu0
        %v618 = vadd.f32 %v525, %v617
        %v619 = vpop.f32.mrb[0].mxu0
        %v620 = vpop.f32.mrb[0].mxu0
        %v621 = vadd.f32 %v525, %v620
        %v622 = vpop.f32.mrb[0].mxu0
        %623 = vmatprep.mubr.bf16.mxu0 0
        %624 = vmatmul.mubr.bf16.gmra.mrb[0].mxu0 %v487
        %v625 = vpop.f32.mrb[0].mxu0
        %v626 = vadd.f32 %v525, %v625
        %v627 = vpop.f32.mrb[0].mxu0
        %v628 = vpop.f32.mrb[0].mxu0
        %v629 = vadd.f32 %v525, %v628
        %v630 = vpop.f32.mrb[0].mxu0
        %631 = vmatprep.mubr.bf16.mxu0 0
        %632 = vmatmul.mubr.bf16.gmra.mrb[0].mxu0 %v490
        %v633 = vpop.f32.mrb[0].mxu0
        %v634 = vadd.f32 %v525, %v633
        %v635 = vpop.f32.mrb[0].mxu0
        %v636 = vpop.f32.mrb[0].mxu0
        %v637 = vadd.f32 %v525, %v636
        %v638 = vpop.f32.mrb[0].mxu0
        %639 = vmatprep.mubr.bf16.mxu0 0
        %640 = vmatmul.mubr.bf16.gmra.mrb[0].mxu0 %v493
        %v641 = vpop.f32.mrb[0].mxu0
        %v642 = vadd.f32 %v525, %v641
        %v643 = vpop.f32.mrb[0].mxu0
        %v644 = vpop.f32.mrb[0].mxu0
        %v645 = vadd.f32 %v525, %v644
        %v646 = vpop.f32.mrb[0].mxu0
        %647 = vmatprep.mubr.bf16.mxu0 0
        %648 = vmatmul.mubr.bf16.gmra.mrb[0].mxu0 %v496
        %v649 = vpop.f32.mrb[0].mxu0
        %v650 = vadd.f32 %v525, %v649
        %v651 = vpop.f32.mrb[0].mxu0
        %v652 = vpop.f32.mrb[0].mxu0
        %v653 = vadd.f32 %v525, %v652
        %v654 = vpop.f32.mrb[0].mxu0
        %655 = vmatprep.mubr.bf16.mxu0 0
        %656 = vmatmul.mubr.bf16.gmra.mrb[0].mxu0 %v499
        %v657 = vpop.f32.mrb[0].mxu0
        %v658 = vadd.f32 %v525, %v657
        %v659 = vpop.f32.mrb[0].mxu0
        %v660 = vpop.f32.mrb[0].mxu0
        %v661 = vadd.f32 %v525, %v660
        %v662 = vpop.f32.mrb[0].mxu0
        %663 = vmatprep.mubr.bf16.mxu0 0
        %664 = vmatmul.mubr.bf16.gmra.mrb[0].mxu0 %v502
        %v665 = vpop.f32.mrb[0].mxu0
        %v666 = vadd.f32 %v525, %v665
        %v667 = vpop.f32.mrb[0].mxu0
        %v668 = vpop.f32.mrb[0].mxu0
        %v669 = vadd.f32 %v525, %v668
        %v670 = vpop.f32.mrb[0].mxu0
        %671 = vdwg.mxu0
        %v672 = vmax.f32 %v610, 0.0
        %v673 = vmax.f32 %v613, 0.0
        %v674 = vmax.f32 %v618, 0.0
        %v675 = vmax.f32 %v621, 0.0
        %v676 = vmax.f32 %v626, 0.0
        %v677 = vmax.f32 %v629, 0.0
        %v678 = vmax.f32 %v634, 0.0
        %v679 = vmax.f32 %v637, 0.0
        %v680 = vmax.f32 %v642, 0.0
        %v681 = vmax.f32 %v645, 0.0
        %v682 = vmax.f32 %v650, 0.0
        %v683 = vmax.f32 %v653, 0.0
        %v684 = vmax.f32 %v658, 0.0
        %v685 = vmax.f32 %v661, 0.0
        %v686 = vmax.f32 %v666, 0.0
        %v687 = vmax.f32 %v669, 0.0
        %v688 = vmin.f32 %v672, 6.0
        %v689 = vmin.f32 %v673, 6.0
        %v690 = vmin.f32 %v674, 6.0
        %v691 = vmin.f32 %v675, 6.0
        %v692 = vmin.f32 %v676, 6.0
        %v693 = vmin.f32 %v677, 6.0
        %v694 = vmin.f32 %v678, 6.0
        %v695 = vmin.f32 %v679, 6.0
        %v696 = vmin.f32 %v680, 6.0
        %v697 = vmin.f32 %v681, 6.0
        %v698 = vmin.f32 %v682, 6.0
        %v699 = vmin.f32 %v683, 6.0
        %v700 = vmin.f32 %v684, 6.0
        %v701 = vmin.f32 %v685, 6.0
        %v702 = vmin.f32 %v686, 6.0
        %v703 = vmin.f32 %v687, 6.0
        %704 = vst [vmem:[%s177] sm:$0xff] %v688
        %705 = vst [vmem:[%s177 + $0x8] sm:$0xff] %v689
        %706 = vst [vmem:[%s177 + $0x10] sm:$0xff] %v690
        %707 = vst [vmem:[%s177 + $0x18] sm:$0xff] %v691
        %708 = vst [vmem:[%s177 + $0x20] sm:$0xff] %v692
        %709 = vst [vmem:[%s177 + $0x28] sm:$0xff] %v693
        %710 = vst [vmem:[%s177 + $0x30] sm:$0xff] %v694
        %711 = vst [vmem:[%s177 + $0x38] sm:$0xff] %v695
        %712 = vst [vmem:[%s177 + $0x40] sm:$0xff] %v696
        %713 = vst [vmem:[%s177 + $0x48] sm:$0xff] %v697
        %714 = vst [vmem:[%s177 + $0x50] sm:$0xff] %v698
        %715 = vst [vmem:[%s177 + $0x58] sm:$0xff] %v699
        %716 = vst [vmem:[%s177 + $0x60] sm:$0xff] %v700
        %717 = vst [vmem:[%s177 + $0x68] sm:$0xff] %v701
        %718 = vst [vmem:[%s177 + $0x70] sm:$0xff] %v702
        %719 = vst [vmem:[%s177 + $0x78] sm:$0xff] %v703
        %s720 = sand.u32 %s107, 1
        %s721 = scalar_lea.sflag [#allocation3], %s720
        %s722 = sand.u32 %s107, 1
        %s723 = smul.addr %s722, 128
        %s724 = scalar_lea.vmem [#allocation2], %s723
        // Predicated region
        $region33: #{tpu_custom_call.1} parent=31 // pred_check
          %p725 = pneg %p117
        $region34: #{tpu_custom_call.1} parent=31 // pred_check_branch
          %727 = sbr.rel (%p725) target = $region36
        $region35: #{tpu_custom_call.1} parent=31 // pred_region
          %s728 = smul.u32 8, %s22
          %s730 = ssub.s32 2048, 2048
          %731 = vsyncadd %s721, %s730
          %s732 = smul.addr %s728, 2
          %s733 = smul.addr %s21, 32
          %s734 = sadd.s32 %s732, %s733
          %s735 = smul.addr %s734, 128
          %s736 = scalar_lea.hbm %s3, %s735
          %s737 = sshll.u32 %s724, 4
          %s738 = int_to_ptr.vmem [resolvable:$true] %s737
          %743 = dma.vmem_to_hbm [thread:$0]  %s738, 2048, %s736, %s721, 128, 128, 8
        $region36: #{tpu_custom_call.1} parent=31 // pred_fallthru
          _
      $region32: #{tpu_custom_call.1} parent=5 // pred_fallthru
        _
      %p744 = scmp.le.s32.totalorder 2, %s12
      // Predicated region
      $region37: #{tpu_custom_call.1} parent=5 // pred_check
        %p745 = pneg %p744
      $region38: #{tpu_custom_call.1} parent=5 // pred_check_branch
        %747 = sbr.rel (%p745) target = $region40
      $region39: #{tpu_custom_call.1} parent=5 // pred_region
        %s748 = ssub.s32 %s12, 2
        // Predicated region
        $region41: #{tpu_custom_call.1} parent=39 // pred_check
          %p749 = pneg %p123
        $region42: #{tpu_custom_call.1} parent=39 // pred_check_branch
          %751 = sbr.rel (%p749) target = $region44
        $region43: #{tpu_custom_call.1} parent=39 // pred_region
          %s752 = sand.u32 %s108, 1
          %s753 = scalar_lea.sflag [#allocation3], %s752
          %s754 = sand.u32 %s108, 1
          %s755 = smul.addr %s754, 128
          %s756 = scalar_lea.vmem [#allocation2], %s755
          %757 = dma.done %s753, 2048
        $region44: #{tpu_custom_call.1} parent=39 // pred_fallthru
          _
      $region40: #{tpu_custom_call.1} parent=5 // pred_fallthru
        _
    $region6: #{tpu_custom_call.1} parent=1 // loop_footer
      %s16 = sadd.s32 1, %s12
    $region7: #{tpu_custom_call.1} parent=1 // loop_footer_branch
      %11 = sbr.rel target = $region3
    $region8: #{tpu_custom_call.1} parent=1 // loop_exit
      _
    %758 = vsyncpa [#allocation3], 1
    %s759 = scalar_lea.sflag [#allocation3], 1
    %760 = vsyncpa %s759, 1

</llo_original>
